<compile_context>
chip_gen: v7x
topology: tpu7x:2x2x1
jax: 0.10.0
libtpu: 0.0.40
codegen_flags: <defaults>
</compile_context>

<pallas_src>
import functools

import jax
import jax.numpy as jnp
from jax.experimental import pallas as pl
from jax.experimental.pallas import tpu as pltpu


def _mlp_body(x, w1t, b1, w2t, b2, w3t, b3):
    # x: [TB, 23] bf16; weights pre-transposed bf16; biases [1, out] f32.
    h1 = jax.nn.sigmoid(jnp.dot(x, w1t, preferred_element_type=jnp.float32) + b1)
    h2 = jax.nn.sigmoid(jnp.dot(h1.astype(jnp.bfloat16), w2t,
                                preferred_element_type=jnp.float32) + b2)
    h3 = jax.nn.sigmoid(jnp.dot(h2.astype(jnp.bfloat16), w3t,
                                preferred_element_type=jnp.float32) + b3)
    return h3                                                            # [TB, 5] f32


def _mlp_kernel(x_ref, w1_ref, b1_ref, w2_ref, b2_ref, w3_ref, b3_ref, h_ref):
    h_ref[...] = _mlp_body(x_ref[...], w1_ref[...], b1_ref[...],
                           w2_ref[...], b2_ref[...],
                           w3_ref[...], b3_ref[...]).astype(h_ref.dtype)


def _fused_kernel(x_ref, w1_ref, b1_ref, w2_ref, b2_ref, w3_ref, b3_ref, o_ref,
                  *, valid_rows):
    # Single-tile path: MLP + softmax over dim=0 in one kernel.
    h3 = _mlp_body(x_ref[...], w1_ref[...], b1_ref[...],
                   w2_ref[...], b2_ref[...], w3_ref[...], b3_ref[...])   # [TB, 5] f32
    rows = jax.lax.broadcasted_iota(jnp.int32, h3.shape, 0)
    valid = rows < valid_rows                                            # mask padded rows
    m = jnp.max(jnp.where(valid, h3, -jnp.inf), axis=0, keepdims=True)   # [1, 5]
    e = jnp.where(valid, jnp.exp(h3 - m), 0.0)
    denom = jnp.sum(e, axis=0, keepdims=True)                            # [1, 5]
    o_ref[...] = (e * pl.reciprocal(denom, approx=True)).astype(o_ref.dtype)


def _softmax_dim0_kernel(h_ref, o_ref):
    # softmax over dim=0 (the whole batch axis), matching nn.Softmax(dim=0).
    h = h_ref[...].astype(jnp.float32)                                   # [B, 5]
    m = jnp.max(h, axis=0, keepdims=True)
    e = jnp.exp(h - m)
    denom = jnp.sum(e, axis=0, keepdims=True)
    o_ref[...] = (e * pl.reciprocal(denom, approx=True)).astype(o_ref.dtype)


def _round_up(a, m):
    return ((a + m - 1) // m) * m


def logreg_forward(x, params, *, block_b=2048):
    """x: [B, 23] float32.  params: PyTorch-shaped weights ([out, in]) and biases ([out])."""
    w1, b1 = params["w1"], params["b1"]   # [23, 23], [23]
    w2, b2 = params["w2"], params["b2"]   # [10, 23], [10]
    w3, b3 = params["w3"], params["b3"]   # [5, 10],  [5]

    B, F = x.shape
    H1, H2, C = w1.shape[0], w2.shape[0], w3.shape[0]

    # Batch tile: multiple of 8 sublanes; pad B up so the grid divides evenly.
    tb = _round_up(min(block_b, _round_up(B, 8)), 8)
    b_pad = _round_up(B, tb)
    if b_pad != B:
        x = jnp.pad(x, ((0, b_pad - B), (0, 0)))

    # bf16 operands for the MXU; biases stay f32, reshaped [1, out] for 2-D broadcast.
    x_bf = x.astype(jnp.bfloat16)
    w1t = w1.T.astype(jnp.bfloat16)
    w2t = w2.T.astype(jnp.bfloat16)
    w3t = w3.T.astype(jnp.bfloat16)
    b1r = b1.reshape(1, -1).astype(jnp.float32)
    b2r = b2.reshape(1, -1).astype(jnp.float32)
    b3r = b3.reshape(1, -1).astype(jnp.float32)

    vmem = pl.BlockSpec(memory_space=pltpu.MemorySpace.VMEM)

    if b_pad == tb:
        # Fast path: the whole (padded) batch is one tile -> fully fused kernel.
        out = pl.pallas_call(
            functools.partial(_fused_kernel, valid_rows=B),
            out_shape=jax.ShapeDtypeStruct((b_pad, C), jnp.float32),
            in_specs=[vmem] * 7,
            out_specs=vmem,
        )(x_bf, w1t, b1r, w2t, b2r, w3t, b3r)
        return out[:B]

    # General path: batch-tiled MLP (stage 1) + dim-0 softmax finalize (stage 2).
    const = lambda i: (0, 0)   # weights/biases: same block every step -> VMEM-resident

    h3 = pl.pallas_call(
        _mlp_kernel,
        out_shape=jax.ShapeDtypeStruct((b_pad, C), jnp.float32),
        grid_spec=pltpu.PrefetchScalarGridSpec(
            num_scalar_prefetch=0,
            grid=(b_pad // tb,),
            in_specs=[
                pl.BlockSpec((tb, F), lambda i: (i, 0)),   # x: tiled along batch
                pl.BlockSpec((F, H1), const),              # W1^T
                pl.BlockSpec((1, H1), const),              # b1
                pl.BlockSpec((H1, H2), const),             # W2^T
                pl.BlockSpec((1, H2), const),              # b2
                pl.BlockSpec((H2, C), const),              # W3^T
                pl.BlockSpec((1, C), const),               # b3
            ],
            out_specs=pl.BlockSpec((tb, C), lambda i: (i, 0)),
        ),
        compiler_params=pltpu.CompilerParams(
            dimension_semantics=("parallel",),             # no cross-step carry
        ),
    )(x_bf, w1t, b1r, w2t, b2r, w3t, b3r)

    # Drop padded rows BEFORE the dim-0 softmax so they cannot pollute the reduction.
    h3 = h3[:B]

    out = pl.pallas_call(
        _softmax_dim0_kernel,
        out_shape=jax.ShapeDtypeStruct((B, C), jnp.float32),
        in_specs=[vmem],
        out_specs=vmem,
    )(h3)
    return out


def init_params(key):
    """Deterministic init mimicking PyTorch Linear default: U(-1/sqrt(fan_in), 1/sqrt(fan_in))."""
    def linear(key, fan_in, fan_out):
        kw, kb = jax.random.split(key)
        bound = 1.0 / jnp.sqrt(fan_in)
        w = jax.random.uniform(kw, (fan_out, fan_in), jnp.float32, -bound, bound)
        b = jax.random.uniform(kb, (fan_out,), jnp.float32, -bound, bound)
        return w, b

    k1, k2, k3 = jax.random.split(key, 3)
    w1, b1 = linear(k1, 23, 23)
    w2, b2 = linear(k2, 23, 10)
    w3, b3 = linear(k3, 10, 5)
    return {"w1": w1, "b1": b1, "w2": w2, "b2": b2, "w3": w3, "b3": b3}


def _reference(x, p):
    h = jax.nn.sigmoid(x @ p["w1"].T + p["b1"])
    h = jax.nn.sigmoid(h @ p["w2"].T + p["b2"])
    h = jax.nn.sigmoid(h @ p["w3"].T + p["b3"])
    return jax.nn.softmax(h, axis=0)


if __name__ == "__main__":
    key = jax.random.PRNGKey(0)
    kx1, kx2, kp = jax.random.split(key, 3)
    params = init_params(kp)

    # Case 1: B not a multiple of 8 -> fused single-tile path (padding masked inside softmax).
    B1 = 50
    x1 = jax.random.normal(kx1, (B1, 23), dtype=jnp.float32)
    out1 = jax.block_until_ready(logreg_forward(x1, params))
    ref1 = _reference(x1, params)
    assert out1.shape == (B1, 5)
    assert jnp.allclose(out1, ref1, atol=1e-3, rtol=5e-2), "case1 mismatch vs reference"
    assert jnp.allclose(jnp.sum(out1, axis=0), jnp.ones((5,)), atol=1e-2)

    # Case 2: multi-step grid (4 batch tiles of 64 rows) -> two-stage path,
    # softmax still over the full dim=0.
    B2 = 256
    x2 = jax.random.normal(kx2, (B2, 23), dtype=jnp.float32)
    out2 = jax.block_until_ready(logreg_forward(x2, params, block_b=64))
    ref2 = _reference(x2, params)
    assert out2.shape == (B2, 5)
    assert jnp.allclose(out2, ref2, atol=1e-3, rtol=5e-2), "case2 mismatch vs reference"
    assert jnp.allclose(jnp.sum(out2, axis=0), jnp.ones((5,)), atol=1e-2)

    print("KERNEL_OK")
</pallas_src>

<mosaic_0001>
module attributes {stable_mosaic.version = 11 : i64} {
  func.func @_fused_kernel(%arg0: memref<56x23xbf16, #tpu.memory_space<vmem>>, %arg1: memref<23x23xbf16, #tpu.memory_space<vmem>>, %arg2: memref<1x23xf32, #tpu.memory_space<vmem>>, %arg3: memref<23x10xbf16, #tpu.memory_space<vmem>>, %arg4: memref<1x10xf32, #tpu.memory_space<vmem>>, %arg5: memref<10x5xbf16, #tpu.memory_space<vmem>>, %arg6: memref<1x5xf32, #tpu.memory_space<vmem>>, %arg7: memref<56x5xf32, #tpu.memory_space<vmem>>) attributes {dimension_semantics = [], scalar_prefetch = 0 : i64, scratch_operands = 0 : i64, tpu.core_type = #tpu.core_type<tc>} {
    %c0 = arith.constant 0 : index
    %c0_0 = arith.constant 0 : index
    %0 = vector.load %arg0[%c0, %c0_0] : memref<56x23xbf16, #tpu.memory_space<vmem>>, vector<56x23xbf16>
    %c0_1 = arith.constant 0 : index
    %c0_2 = arith.constant 0 : index
    %1 = vector.load %arg1[%c0_1, %c0_2] : memref<23x23xbf16, #tpu.memory_space<vmem>>, vector<23x23xbf16>
    %c0_3 = arith.constant 0 : index
    %c0_4 = arith.constant 0 : index
    %2 = vector.load %arg2[%c0_3, %c0_4] : memref<1x23xf32, #tpu.memory_space<vmem>>, vector<1x23xf32>
    %c0_5 = arith.constant 0 : index
    %c0_6 = arith.constant 0 : index
    %3 = vector.load %arg3[%c0_5, %c0_6] : memref<23x10xbf16, #tpu.memory_space<vmem>>, vector<23x10xbf16>
    %c0_7 = arith.constant 0 : index
    %c0_8 = arith.constant 0 : index
    %4 = vector.load %arg4[%c0_7, %c0_8] : memref<1x10xf32, #tpu.memory_space<vmem>>, vector<1x10xf32>
    %c0_9 = arith.constant 0 : index
    %c0_10 = arith.constant 0 : index
    %5 = vector.load %arg5[%c0_9, %c0_10] : memref<10x5xbf16, #tpu.memory_space<vmem>>, vector<10x5xbf16>
    %c0_11 = arith.constant 0 : index
    %c0_12 = arith.constant 0 : index
    %6 = vector.load %arg6[%c0_11, %c0_12] : memref<1x5xf32, #tpu.memory_space<vmem>>, vector<1x5xf32>
    %cst = arith.constant dense<0.000000e+00> : vector<56x23xf32>
    %7 = tpu.matmul %0, %1, %cst {dimension_numbers = #tpu.dot_dimension_numbers<[1], [0], [0], [1], [0, 0, 1, 1], [], []>} : vector<56x23xbf16>, vector<23x23xbf16>, vector<56x23xf32> -> vector<56x23xf32>
    %8 = vector.broadcast %2 : vector<1x23xf32> to vector<56x23xf32>
    %9 = arith.addf %7, %8 : vector<56x23xf32>
    %10 = arith.negf %9 : vector<56x23xf32>
    %11 = math.exp %10 : vector<56x23xf32>
    %cst_13 = arith.constant 1.000000e+00 : f32
    %12 = vector.broadcast %cst_13 : f32 to vector<56x23xf32>
    %13 = arith.addf %12, %11 : vector<56x23xf32>
    %14 = arith.divf %12, %13 : vector<56x23xf32>
    %15 = arith.truncf %14 : vector<56x23xf32> to vector<56x23xbf16>
    %cst_14 = arith.constant dense<0.000000e+00> : vector<56x10xf32>
    %16 = tpu.matmul %15, %3, %cst_14 {dimension_numbers = #tpu.dot_dimension_numbers<[1], [0], [0], [1], [0, 0, 1, 1], [], []>} : vector<56x23xbf16>, vector<23x10xbf16>, vector<56x10xf32> -> vector<56x10xf32>
    %17 = vector.broadcast %4 : vector<1x10xf32> to vector<56x10xf32>
    %18 = arith.addf %16, %17 : vector<56x10xf32>
    %19 = arith.negf %18 : vector<56x10xf32>
    %20 = math.exp %19 : vector<56x10xf32>
    %cst_15 = arith.constant 1.000000e+00 : f32
    %21 = vector.broadcast %cst_15 : f32 to vector<56x10xf32>
    %22 = arith.addf %21, %20 : vector<56x10xf32>
    %23 = arith.divf %21, %22 : vector<56x10xf32>
    %24 = arith.truncf %23 : vector<56x10xf32> to vector<56x10xbf16>
    %cst_16 = arith.constant dense<0.000000e+00> : vector<56x5xf32>
    %25 = tpu.matmul %24, %5, %cst_16 {dimension_numbers = #tpu.dot_dimension_numbers<[1], [0], [0], [1], [0, 0, 1, 1], [], []>} : vector<56x10xbf16>, vector<10x5xbf16>, vector<56x5xf32> -> vector<56x5xf32>
    %26 = vector.broadcast %6 : vector<1x5xf32> to vector<56x5xf32>
    %27 = arith.addf %25, %26 : vector<56x5xf32>
    %28 = arith.negf %27 : vector<56x5xf32>
    %29 = math.exp %28 : vector<56x5xf32>
    %cst_17 = arith.constant 1.000000e+00 : f32
    %30 = vector.broadcast %cst_17 : f32 to vector<56x5xf32>
    %31 = arith.addf %30, %29 : vector<56x5xf32>
    %32 = arith.divf %30, %31 : vector<56x5xf32>
    %33 = tpu.iota {dimensions = array<i32: 0>} : vector<56x5xi32>
    %c50_i32 = arith.constant 50 : i32
    %34 = vector.broadcast %c50_i32 : i32 to vector<56x5xi32>
    %35 = arith.cmpi slt, %33, %34 : vector<56x5xi32>
    %cst_18 = arith.constant 0xFF800000 : f32
    %36 = vector.broadcast %cst_18 : f32 to vector<56x5xf32>
    %37 = arith.select %35, %32, %36 : vector<56x5xi1>, vector<56x5xf32>
    %cst_19 = arith.constant dense<0xFF800000> : vector<5xf32>
    %38 = vector.multi_reduction <maximumf>, %37, %cst_19 [0] : vector<56x5xf32> to vector<5xf32>
    %39 = vector.shape_cast %38 : vector<5xf32> to vector<1x5xf32>
    %40 = vector.broadcast %39 : vector<1x5xf32> to vector<56x5xf32>
    %41 = arith.subf %32, %40 : vector<56x5xf32>
    %42 = math.exp %41 : vector<56x5xf32>
    %cst_20 = arith.constant 0.000000e+00 : f32
    %43 = vector.broadcast %cst_20 : f32 to vector<56x5xf32>
    %44 = arith.select %35, %42, %43 : vector<56x5xi1>, vector<56x5xf32>
    %cst_21 = arith.constant dense<0.000000e+00> : vector<5xf32>
    %45 = vector.multi_reduction <add>, %44, %cst_21 [0] : vector<56x5xf32> to vector<5xf32>
    %46 = vector.shape_cast %45 : vector<5xf32> to vector<1x5xf32>
    %47 = tpu.reciprocal %46 {approx = true} : vector<1x5xf32> -> vector<1x5xf32>
    %48 = vector.broadcast %47 : vector<1x5xf32> to vector<56x5xf32>
    %49 = arith.mulf %44, %48 : vector<56x5xf32>
    %c0_22 = arith.constant 0 : index
    %c0_23 = arith.constant 0 : index
    %50 = vector.load %arg7[%c0_22, %c0_23] : memref<56x5xf32, #tpu.memory_space<vmem>>, vector<56x5xf32>
    tpu.vector_store %arg7[%c0_22, %c0_23], %49 {strides = array<i32>} : memref<56x5xf32, #tpu.memory_space<vmem>>, vector<56x5xf32>,
    return
  }
}

</mosaic_0001>

<llo_original>
// kernel: tpu_custom_call.1
$region0: #{tpu_custom_call.1}
  #allocation0 [shape = 'u32[]', space=smem, size = 0x4, offset = 0x4, fixed_abs, tag = 'smem constant byte address 0x4 - core index']
  #allocation1 [shape = 'u32[144,128]{1,0:T(1,128)}', space=vmem, size = 0x12000, scoped, tag = 'internal scratch']
  %s0 = inlined_call_operand.vmem [shape: bf16[56,23], index: 0, kind: input, shape index: {}]
  %s1 = inlined_call_operand.vmem [shape: bf16[23,23], index: 1, kind: input, shape index: {}]
  %s2 = inlined_call_operand.vmem [shape: f32[1,23], index: 2, kind: input, shape index: {}]
  %s3 = inlined_call_operand.vmem [shape: bf16[23,10], index: 3, kind: input, shape index: {}]
  %s4 = inlined_call_operand.vmem [shape: f32[1,10], index: 4, kind: input, shape index: {}]
  %s5 = inlined_call_operand.vmem [shape: bf16[10,5], index: 5, kind: input, shape index: {}]
  %s6 = inlined_call_operand.vmem [shape: f32[1,5], index: 6, kind: input, shape index: {}]
  %s7 = inlined_call_operand.vmem [shape: f32[56,5], index: 7, kind: output, shape index: {}]
  %s8 = sld [smem:[#allocation0]]
  $region38: #{tpu_custom_call.1} parent=0
    _
  %s10 = ssub.s32 1, %s8
  %s11 = scalar_select 0, %s10, %s8
  // Predicated region
  $region2: #{tpu_custom_call.1} parent=0 // pred_check
    _
  $region3: #{tpu_custom_call.1} parent=0 // pred_check_branch
    %13 = sbr.rel (0) target = $region5
  $region4: #{tpu_custom_call.1} parent=0 // pred_region
    _
  $region5: #{tpu_custom_call.1} parent=0 // pred_fallthru
    _
  // Predicated region
  $region6: #{tpu_custom_call.1} parent=0 // pred_check
    _
  $region7: #{tpu_custom_call.1} parent=0 // pred_check_branch
    %15 = sbr.rel (0) target = $region9
  $region8: #{tpu_custom_call.1} parent=0 // pred_region
    _
  $region9: #{tpu_custom_call.1} parent=0 // pred_fallthru
    _
  // Predicated region
  $region10: #{tpu_custom_call.1} parent=0 // pred_check
    _
  $region11: #{tpu_custom_call.1} parent=0 // pred_check_branch
    %17 = sbr.rel (0) target = $region13
  $region12: #{tpu_custom_call.1} parent=0 // pred_region
    _
  $region13: #{tpu_custom_call.1} parent=0 // pred_fallthru
    _
  // Predicated region
  $region14: #{tpu_custom_call.1} parent=0 // pred_check
    _
  $region15: #{tpu_custom_call.1} parent=0 // pred_check_branch
    %19 = sbr.rel (0) target = $region17
  $region16: #{tpu_custom_call.1} parent=0 // pred_region
    _
  $region17: #{tpu_custom_call.1} parent=0 // pred_fallthru
    _
  // Predicated region
  $region18: #{tpu_custom_call.1} parent=0 // pred_check
    _
  $region19: #{tpu_custom_call.1} parent=0 // pred_check_branch
    %21 = sbr.rel (0) target = $region21
  $region20: #{tpu_custom_call.1} parent=0 // pred_region
    _
  $region21: #{tpu_custom_call.1} parent=0 // pred_fallthru
    _
  // Predicated region
  $region22: #{tpu_custom_call.1} parent=0 // pred_check
    _
  $region23: #{tpu_custom_call.1} parent=0 // pred_check_branch
    %23 = sbr.rel (0) target = $region25
  $region24: #{tpu_custom_call.1} parent=0 // pred_region
    _
  $region25: #{tpu_custom_call.1} parent=0 // pred_fallthru
    _
  // Predicated region
  $region26: #{tpu_custom_call.1} parent=0 // pred_check
    _
  $region27: #{tpu_custom_call.1} parent=0 // pred_check_branch
    %25 = sbr.rel (0) target = $region29
  $region28: #{tpu_custom_call.1} parent=0 // pred_region
    _
  $region29: #{tpu_custom_call.1} parent=0 // pred_fallthru
    _
  %v27 = vld [vmem:[%s0] sm:$0xf]
  %v28 = vld [vmem:[%s0 + $0x4] sm:$0xf]
  %v29 = vld [vmem:[%s0 + $0x8] sm:$0xf]
  %v30 = vld [vmem:[%s0 + $0xc] sm:$0xf]
  %v31 = vld [vmem:[%s0 + $0x10] sm:$0xf]
  %v32 = vld [vmem:[%s0 + $0x14] sm:$0xf]
  %v33 = vld [vmem:[%s0 + $0x18] sm:$0xf]
  %v34 = vld [vmem:[%s1] sm:$0xf]
  %v35 = vld [vmem:[%s1 + $0x4] sm:$0xf]
  %v36 = vld [vmem:[%s1 + $0x8] sm:$0xf]
  %v37 = vld [vmem:[%s2] sm:$0x1]
  %v38 = vld [vmem:[%s3] sm:$0xf]
  %v39 = vld [vmem:[%s3 + $0x4] sm:$0xf]
  %v40 = vld [vmem:[%s3 + $0x8] sm:$0xf]
  %v41 = vld [vmem:[%s4] sm:$0x1]
  %v42 = vld [vmem:[%s5] sm:$0xf]
  %v43 = vld [vmem:[%s5 + $0x4] sm:$0x1]
  %v44 = vld [vmem:[%s6] sm:$0x1]
  %v46 = vlaneseq
  %v47 = vshrl.u32 %v46, 7
  %v48 = vsub.s32 0, %v47
  %v49 = vrot.slane %v37, %v48
  %v58 = vunpack.c.l.b16 %v27
  %v59 = vunpack.c.l.b16 %v28
  %v60 = vunpack.c.l.b16 %v29
  %v61 = vunpack.c.l.b16 %v30
  %v62 = vunpack.c.l.b16 %v31
  %v63 = vunpack.c.l.b16 %v32
  %v64 = vunpack.c.l.b16 %v33
  %v65 = vpack.c.b16 %v59, %v58
  %v66 = vpack.c.b16 %v61, %v60
  %v67 = vpack.c.b16 %v63, %v62
  %v68 = vpack.c.b16 %v64, %v64
  %v72 = vunpack.c.l.b16 %v34
  %v73 = vunpack.c.l.b16 %v35
  %v74 = vunpack.c.l.b16 %v36
  %v75 = vpack.c.b16 %v73, %v72
  %v76 = vpack.c.b16 %v74, %v74
  %vm78 = vcmask 187392
  %v80 = vsel %vm78, %v65, 0
  %v83 = vsel %vm78, %v66, 0
  %v86 = vsel %vm78, %v67, 0
  %v89 = vsel %vm78, %v68, 0
  %vm91 = vcmask 1042432
  %vm92 = vcmask 1043456
  %v93 = vsel %vm91, 4294967295, 65535
  %v94 = vsel %vm92, %v93, 0
  %v96 = vand.u32 %v76, %v94
  %98 = vmatprep.subr.bf16.mxu0 0
  %99 = vmatpush1.bf16.msra.mxu0 %v75
  %100 = vmatprep.subr.bf16.mxu0 0
  %101 = vmatpush1.bf16.msra.mxu0 %v96
  %102 = vmatprep.subr.bf16.mxu0 0
  %103 = vmatpush1.bf16.msra.mxu0 0
  %104 = vmatprep.subr.bf16.mxu0 0
  %105 = vmatpush1.bf16.msra.mxu0 0
  %106 = vmatprep.subr.bf16.mxu0 0
  %107 = vmatpush1.bf16.msra.mxu0 0
  %108 = vmatprep.subr.bf16.mxu0 0
  %109 = vmatpush1.bf16.msra.mxu0 0
  %110 = vmatprep.subr.bf16.mxu0 0
  %111 = vmatpush1.bf16.msra.mxu0 0
  %112 = vmatprep.subr.bf16.mxu0 0
  %113 = vmatpush1.bf16.msra.mxu0 0
  %114 = vmatprep.subr.bf16.mxu0 0
  %115 = vmatpush1.bf16.msra.mxu0 0
  %116 = vmatprep.subr.bf16.mxu0 0
  %117 = vmatpush1.bf16.msra.mxu0 0
  %118 = vmatprep.subr.bf16.mxu0 0
  %119 = vmatpush1.bf16.msra.mxu0 0
  %120 = vmatprep.subr.bf16.mxu0 0
  %121 = vmatpush1.bf16.msra.mxu0 0
  %122 = vmatprep.subr.bf16.mxu0 0
  %123 = vmatpush1.bf16.msra.mxu0 0
  %124 = vmatprep.subr.bf16.mxu0 0
  %125 = vmatpush1.bf16.msra.mxu0 0
  %126 = vmatprep.subr.bf16.mxu0 0
  %127 = vmatpush1.bf16.msra.mxu0 0
  %128 = vmatprep.subr.bf16.mxu0 0
  %129 = vmatpush1.bf16.msra.mxu0 0
  %130 = vmatprep.mubr.bf16.mxu0 0
  %131 = vmatmul.mubr.bf16.gmra.mrb[0].mxu0 %v80
  %v132 = vpop.f32.mrb[0].mxu0
  %v133 = vadd.f32 %v49, %v132
  %v134 = vpop.f32.mrb[0].mxu0
  %v135 = vpop.f32.mrb[0].mxu0
  %v136 = vadd.f32 %v49, %v135
  %v137 = vpop.f32.mrb[0].mxu0
  %138 = vmatprep.mubr.bf16.mxu0 0
  %139 = vmatmul.mubr.bf16.gmra.mrb[0].mxu0 %v83
  %v140 = vpop.f32.mrb[0].mxu0
  %v141 = vadd.f32 %v49, %v140
  %v142 = vpop.f32.mrb[0].mxu0
  %v143 = vpop.f32.mrb[0].mxu0
  %v144 = vadd.f32 %v49, %v143
  %v145 = vpop.f32.mrb[0].mxu0
  %146 = vmatprep.mubr.bf16.mxu0 0
  %147 = vmatmul.mubr.bf16.gmra.mrb[0].mxu0 %v86
  %v148 = vpop.f32.mrb[0].mxu0
  %v149 = vadd.f32 %v49, %v148
  %v150 = vpop.f32.mrb[0].mxu0
  %v151 = vpop.f32.mrb[0].mxu0
  %v152 = vadd.f32 %v49, %v151
  %v153 = vpop.f32.mrb[0].mxu0
  %154 = vmatprep.mubr.bf16.mxu0 0
  %155 = vmatmul.mubr.bf16.gmra.mrb[0].mxu0 %v89
  %v156 = vpop.f32.mrb[0].mxu0
  %v157 = vadd.f32 %v49, %v156
  %v158 = vpop.f32.mrb[0].mxu0
  %v159 = vpop.f32.mrb[0].mxu0
  %v160 = vpop.f32.mrb[0].mxu0
  %161 = vdwg.mxu0
  %v162 = vxor.u32 %v133, 2147483648
  %v163 = vxor.u32 %v136, 2147483648
  %v164 = vxor.u32 %v141, 2147483648
  %v165 = vxor.u32 %v144, 2147483648
  %v166 = vxor.u32 %v149, 2147483648
  %v167 = vxor.u32 %v152, 2147483648
  %v168 = vxor.u32 %v157, 2147483648
  %v169 = vmul.f32 %v162, 1.442695
  %v170 = vpow.pop %v169
  %v171 = vmul.f32 %v163, 1.442695
  %v172 = vpow.pop %v171
  %v173 = vmul.f32 %v164, 1.442695
  %v174 = vpow.pop %v173
  %v175 = vmul.f32 %v165, 1.442695
  %v176 = vpow.pop %v175
  %v177 = vmul.f32 %v166, 1.442695
  %v178 = vpow.pop %v177
  %v179 = vmul.f32 %v167, 1.442695
  %v180 = vpow.pop %v179
  %v181 = vmul.f32 %v168, 1.442695
  %v182 = vpow.pop %v181
  %v183 = vadd.f32 %v170, 1.0
  %v184 = vadd.f32 %v172, 1.0
  %v185 = vadd.f32 %v174, 1.0
  %v186 = vadd.f32 %v176, 1.0
  %v187 = vadd.f32 %v178, 1.0
  %v188 = vadd.f32 %v180, 1.0
  %v189 = vadd.f32 %v182, 1.0
  %v190 = vrcp.pop %v183
  %v191 = vmul.f32 1.0, %v190
  %v192 = vrcp.pop %v184
  %v193 = vmul.f32 1.0, %v192
  %v194 = vrcp.pop %v185
  %v195 = vmul.f32 1.0, %v194
  %v196 = vrcp.pop %v186
  %v197 = vmul.f32 1.0, %v196
  %v198 = vrcp.pop %v187
  %v199 = vmul.f32 1.0, %v198
  %v200 = vrcp.pop %v188
  %v201 = vmul.f32 1.0, %v200
  %v202 = vrcp.pop %v189
  %v203 = vmul.f32 1.0, %v202
  %v204 = vpack.c.bf16 %v193, %v191
  %v205 = vpack.c.bf16 %v197, %v195
  %v206 = vpack.c.bf16 %v201, %v199
  %v207 = vpack.c.bf16 %v203, %v203
  %v209 = vlaneseq
  %v210 = vshrl.u32 %v209, 7
  %v211 = vsub.s32 0, %v210
  %v212 = vrot.slane %v41, %v211
  %v217 = vunpack.c.l.b16 %v38
  %v218 = vunpack.c.l.b16 %v39
  %v219 = vunpack.c.l.b16 %v40
  %v220 = vpack.c.b16 %v218, %v217
  %v221 = vpack.c.b16 %v219, %v219
  %v224 = vsel %vm78, %v204, 0
  %v227 = vsel %vm78, %v205, 0
  %v230 = vsel %vm78, %v206, 0
  %v233 = vsel %vm78, %v207, 0
  %v236 = vand.u32 %v221, %v94
  %238 = vmatprep.subr.bf16.mxu0 0
  %239 = vmatpush1.bf16.msra.mxu0 %v220
  %240 = vmatprep.subr.bf16.mxu0 0
  %241 = vmatpush1.bf16.msra.mxu0 %v236
  %242 = vmatprep.subr.bf16.mxu0 0
  %243 = vmatpush1.bf16.msra.mxu0 0
  %244 = vmatprep.subr.bf16.mxu0 0
  %245 = vmatpush1.bf16.msra.mxu0 0
  %246 = vmatprep.subr.bf16.mxu0 0
  %247 = vmatpush1.bf16.msra.mxu0 0
  %248 = vmatprep.subr.bf16.mxu0 0
  %249 = vmatpush1.bf16.msra.mxu0 0
  %250 = vmatprep.subr.bf16.mxu0 0
  %251 = vmatpush1.bf16.msra.mxu0 0
  %252 = vmatprep.subr.bf16.mxu0 0
  %253 = vmatpush1.bf16.msra.mxu0 0
  %254 = vmatprep.subr.bf16.mxu0 0
  %255 = vmatpush1.bf16.msra.mxu0 0
  %256 = vmatprep.subr.bf16.mxu0 0
  %257 = vmatpush1.bf16.msra.mxu0 0
  %258 = vmatprep.subr.bf16.mxu0 0
  %259 = vmatpush1.bf16.msra.mxu0 0
  %260 = vmatprep.subr.bf16.mxu0 0
  %261 = vmatpush1.bf16.msra.mxu0 0
  %262 = vmatprep.subr.bf16.mxu0 0
  %263 = vmatpush1.bf16.msra.mxu0 0
  %264 = vmatprep.subr.bf16.mxu0 0
  %265 = vmatpush1.bf16.msra.mxu0 0
  %266 = vmatprep.subr.bf16.mxu0 0
  %267 = vmatpush1.bf16.msra.mxu0 0
  %268 = vmatprep.subr.bf16.mxu0 0
  %269 = vmatpush1.bf16.msra.mxu0 0
  %270 = vmatprep.mubr.bf16.mxu0 0
  %271 = vmatmul.mubr.bf16.gmra.mrb[0].mxu0 %v224
  %v272 = vpop.f32.mrb[0].mxu0
  %v273 = vadd.f32 %v212, %v272
  %v274 = vpop.f32.mrb[0].mxu0
  %v275 = vpop.f32.mrb[0].mxu0
  %v276 = vadd.f32 %v212, %v275
  %v277 = vpop.f32.mrb[0].mxu0
  %278 = vmatprep.mubr.bf16.mxu0 0
  %279 = vmatmul.mubr.bf16.gmra.mrb[0].mxu0 %v227
  %v280 = vpop.f32.mrb[0].mxu0
  %v281 = vadd.f32 %v212, %v280
  %v282 = vpop.f32.mrb[0].mxu0
  %v283 = vpop.f32.mrb[0].mxu0
  %v284 = vadd.f32 %v212, %v283
  %v285 = vpop.f32.mrb[0].mxu0
  %286 = vmatprep.mubr.bf16.mxu0 0
  %287 = vmatmul.mubr.bf16.gmra.mrb[0].mxu0 %v230
  %v288 = vpop.f32.mrb[0].mxu0
  %v289 = vadd.f32 %v212, %v288
  %v290 = vpop.f32.mrb[0].mxu0
  %v291 = vpop.f32.mrb[0].mxu0
  %v292 = vadd.f32 %v212, %v291
  %v293 = vpop.f32.mrb[0].mxu0
  %294 = vmatprep.mubr.bf16.mxu0 0
  %295 = vmatmul.mubr.bf16.gmra.mrb[0].mxu0 %v233
  %v296 = vpop.f32.mrb[0].mxu0
  %v297 = vadd.f32 %v212, %v296
  %v298 = vpop.f32.mrb[0].mxu0
  %v299 = vpop.f32.mrb[0].mxu0
  %v300 = vpop.f32.mrb[0].mxu0
  %301 = vdwg.mxu0
  %v302 = vxor.u32 %v273, 2147483648
  %v303 = vxor.u32 %v276, 2147483648
  %v304 = vxor.u32 %v281, 2147483648
  %v305 = vxor.u32 %v284, 2147483648
  %v306 = vxor.u32 %v289, 2147483648
  %v307 = vxor.u32 %v292, 2147483648
  %v308 = vxor.u32 %v297, 2147483648
  %v309 = vmul.f32 %v302, 1.442695
  %v310 = vpow.pop %v309
  %v311 = vmul.f32 %v303, 1.442695
  %v312 = vpow.pop %v311
  %v313 = vmul.f32 %v304, 1.442695
  %v314 = vpow.pop %v313
  %v315 = vmul.f32 %v305, 1.442695
  %v316 = vpow.pop %v315
  %v317 = vmul.f32 %v306, 1.442695
  %v318 = vpow.pop %v317
  %v319 = vmul.f32 %v307, 1.442695
  %v320 = vpow.pop %v319
  %v321 = vmul.f32 %v308, 1.442695
  %v322 = vpow.pop %v321
  %v323 = vadd.f32 %v310, 1.0
  %v324 = vadd.f32 %v312, 1.0
  %v325 = vadd.f32 %v314, 1.0
  %v326 = vadd.f32 %v316, 1.0
  %v327 = vadd.f32 %v318, 1.0
  %v328 = vadd.f32 %v320, 1.0
  %v329 = vadd.f32 %v322, 1.0
  %v330 = vrcp.pop %v323
  %v331 = vmul.f32 1.0, %v330
  %v332 = vrcp.pop %v324
  %v333 = vmul.f32 1.0, %v332
  %v334 = vrcp.pop %v325
  %v335 = vmul.f32 1.0, %v334
  %v336 = vrcp.pop %v326
  %v337 = vmul.f32 1.0, %v336
  %v338 = vrcp.pop %v327
  %v339 = vmul.f32 1.0, %v338
  %v340 = vrcp.pop %v328
  %v341 = vmul.f32 1.0, %v340
  %v342 = vrcp.pop %v329
  %v343 = vmul.f32 1.0, %v342
  %v344 = vpack.c.bf16 %v333, %v331
  %v345 = vpack.c.bf16 %v337, %v335
  %v346 = vpack.c.bf16 %v341, %v339
  %v347 = vpack.c.bf16 %v343, %v343
  %v349 = vlaneseq
  %v350 = vshrl.u32 %v349, 7
  %v351 = vsub.s32 0, %v350
  %v352 = vrot.slane %v44, %v351
  %v356 = vunpack.c.l.b16 %v42
  %v357 = vunpack.c.l.b16 %v43
  %v358 = vpack.c.b16 %v357, %v356
  %vm359 = vcmask 80896
  %v361 = vsel %vm359, %v344, 0
  %v364 = vsel %vm359, %v345, 0
  %v367 = vsel %vm359, %v346, 0
  %v370 = vsel %vm359, %v347, 0
  %vm372 = vcmask 1044480
  %v374 = vsel %vm372, %v358, 0
  %376 = vmatprep.subr.bf16.mxu0 0
  %377 = vmatpush1.bf16.msra.mxu0 %v374
  %378 = vmatprep.subr.bf16.mxu0 0
  %379 = vmatpush1.bf16.msra.mxu0 0
  %380 = vmatprep.subr.bf16.mxu0 0
  %381 = vmatpush1.bf16.msra.mxu0 0
  %382 = vmatprep.subr.bf16.mxu0 0
  %383 = vmatpush1.bf16.msra.mxu0 0
  %384 = vmatprep.subr.bf16.mxu0 0
  %385 = vmatpush1.bf16.msra.mxu0 0
  %386 = vmatprep.subr.bf16.mxu0 0
  %387 = vmatpush1.bf16.msra.mxu0 0
  %388 = vmatprep.subr.bf16.mxu0 0
  %389 = vmatpush1.bf16.msra.mxu0 0
  %390 = vmatprep.subr.bf16.mxu0 0
  %391 = vmatpush1.bf16.msra.mxu0 0
  %392 = vmatprep.subr.bf16.mxu0 0
  %393 = vmatpush1.bf16.msra.mxu0 0
  %394 = vmatprep.subr.bf16.mxu0 0
  %395 = vmatpush1.bf16.msra.mxu0 0
  %396 = vmatprep.subr.bf16.mxu0 0
  %397 = vmatpush1.bf16.msra.mxu0 0
  %398 = vmatprep.subr.bf16.mxu0 0
  %399 = vmatpush1.bf16.msra.mxu0 0
  %400 = vmatprep.subr.bf16.mxu0 0
  %401 = vmatpush1.bf16.msra.mxu0 0
  %402 = vmatprep.subr.bf16.mxu0 0
  %403 = vmatpush1.bf16.msra.mxu0 0
  %404 = vmatprep.subr.bf16.mxu0 0
  %405 = vmatpush1.bf16.msra.mxu0 0
  %406 = vmatprep.subr.bf16.mxu0 0
  %407 = vmatpush1.bf16.msra.mxu0 0
  %408 = vmatprep.mubr.bf16.mxu0 0
  %409 = vmatmul.mubr.bf16.gmra.mrb[0].mxu0 %v361
  %v410 = vpop.f32.mrb[0].mxu0
  %v411 = vadd.f32 %v352, %v410
  %v412 = vpop.f32.mrb[0].mxu0
  %v413 = vpop.f32.mrb[0].mxu0
  %v414 = vadd.f32 %v352, %v413
  %v415 = vpop.f32.mrb[0].mxu0
  %416 = vmatprep.mubr.bf16.mxu0 0
  %417 = vmatmul.mubr.bf16.gmra.mrb[0].mxu0 %v364
  %v418 = vpop.f32.mrb[0].mxu0
  %v419 = vadd.f32 %v352, %v418
  %v420 = vpop.f32.mrb[0].mxu0
  %v421 = vpop.f32.mrb[0].mxu0
  %v422 = vadd.f32 %v352, %v421
  %v423 = vpop.f32.mrb[0].mxu0
  %424 = vmatprep.mubr.bf16.mxu0 0
  %425 = vmatmul.mubr.bf16.gmra.mrb[0].mxu0 %v367
  %v426 = vpop.f32.mrb[0].mxu0
  %v427 = vadd.f32 %v352, %v426
  %v428 = vpop.f32.mrb[0].mxu0
  %v429 = vpop.f32.mrb[0].mxu0
  %v430 = vadd.f32 %v352, %v429
  %v431 = vpop.f32.mrb[0].mxu0
  %432 = vmatprep.mubr.bf16.mxu0 0
  %433 = vmatmul.mubr.bf16.gmra.mrb[0].mxu0 %v370
  %v434 = vpop.f32.mrb[0].mxu0
  %v435 = vadd.f32 %v352, %v434
  %v436 = vpop.f32.mrb[0].mxu0
  %v437 = vpop.f32.mrb[0].mxu0
  %v438 = vpop.f32.mrb[0].mxu0
  %439 = vdwg.mxu0
  %v440 = vxor.u32 %v411, 2147483648
  %v441 = vxor.u32 %v414, 2147483648
  %v442 = vxor.u32 %v419, 2147483648
  %v443 = vxor.u32 %v422, 2147483648
  %v444 = vxor.u32 %v427, 2147483648
  %v445 = vxor.u32 %v430, 2147483648
  %v446 = vxor.u32 %v435, 2147483648
  %v447 = vmul.f32 %v440, 1.442695
  %v448 = vpow.pop %v447
  %v449 = vmul.f32 %v441, 1.442695
  %v450 = vpow.pop %v449
  %v451 = vmul.f32 %v442, 1.442695
  %v452 = vpow.pop %v451
  %v453 = vmul.f32 %v443, 1.442695
  %v454 = vpow.pop %v453
  %v455 = vmul.f32 %v444, 1.442695
  %v456 = vpow.pop %v455
  %v457 = vmul.f32 %v445, 1.442695
  %v458 = vpow.pop %v457
  %v459 = vmul.f32 %v446, 1.442695
  %v460 = vpow.pop %v459
  %v461 = vadd.f32 %v448, 1.0
  %v462 = vadd.f32 %v450, 1.0
  %v463 = vadd.f32 %v452, 1.0
  %v464 = vadd.f32 %v454, 1.0
  %v465 = vadd.f32 %v456, 1.0
  %v466 = vadd.f32 %v458, 1.0
  %v467 = vadd.f32 %v460, 1.0
  %v468 = vrcp.pop %v461
  %v469 = vmul.f32 1.0, %v468
  %v470 = vrcp.pop %v462
  %v471 = vmul.f32 1.0, %v470
  %v472 = vrcp.pop %v463
  %v473 = vmul.f32 1.0, %v472
  %v474 = vrcp.pop %v464
  %v475 = vmul.f32 1.0, %v474
  %v476 = vrcp.pop %v465
  %v477 = vmul.f32 1.0, %v476
  %v478 = vrcp.pop %v466
  %v479 = vmul.f32 1.0, %v478
  %v480 = vrcp.pop %v467
  %v481 = vmul.f32 1.0, %v480
  %v482 = vlaneseq
  %v483 = vshrl.u32 %v482, 7
  %v484 = vadd.s32 %v483, 8
  %v485 = vadd.s32 %v483, 16
  %v486 = vadd.s32 %v483, 24
  %v487 = vadd.s32 %v483, 32
  %v488 = vadd.s32 %v483, 40
  %v489 = vadd.s32 %v483, 48
  %vm490 = vcmp.lt.s32.totalorder %v483, 50
  %vm491 = vcmp.lt.s32.totalorder %v484, 50
  %vm492 = vcmp.lt.s32.totalorder %v485, 50
  %vm493 = vcmp.lt.s32.totalorder %v486, 50
  %vm494 = vcmp.lt.s32.totalorder %v487, 50
  %vm495 = vcmp.lt.s32.totalorder %v488, 50
  %vm496 = vcmp.lt.s32.totalorder %v489, 50
  %v497 = vsel %vm490, %v469, -inf
  %v498 = vsel %vm491, %v471, -inf
  %v499 = vsel %vm492, %v473, -inf
  %v500 = vsel %vm493, %v475, -inf
  %v501 = vsel %vm494, %v477, -inf
  %v502 = vsel %vm495, %v479, -inf
  %v503 = vsel %vm496, %v481, -inf
  %vm504 = vcmask 39936
  %v505 = vsel %vm504, %v497, -inf
  %v506 = vsel %vm504, %v498, -inf
  %v507 = vsel %vm504, %v499, -inf
  %v508 = vsel %vm504, %v500, -inf
  %v509 = vsel %vm504, %v501, -inf
  %v510 = vmax.f32 %v505, %v509
  %v511 = vsel %vm504, %v502, -inf
  %v512 = vmax.f32 %v506, %v511
  %v513 = vsel %vm504, %v503, -inf
  %v514 = vmax.f32 %v507, %v513
  %v515 = vmax.f32 %v510, %v512
  %v516 = vmax.f32 %v514, %v508
  %v517 = vmax.f32 %v515, %v516
  %v518 = vrot.slane %v517, 4
  %v519 = vmax.f32 %v517, %v518
  %v520 = vrot.slane %v519, 2
  %v521 = vmax.f32 %v519, %v520
  %v522 = vrot.slane %v521, 1
  %v523 = vmax.f32 %v521, %v522
  %v524 = vsub.f32 %v469, %v523
  %v525 = vsub.f32 %v471, %v523
  %v526 = vsub.f32 %v473, %v523
  %v527 = vsub.f32 %v475, %v523
  %v528 = vsub.f32 %v477, %v523
  %v529 = vsub.f32 %v479, %v523
  %v530 = vsub.f32 %v481, %v523
  %v531 = vmul.f32 %v524, 1.442695
  %v532 = vpow.pop %v531
  %v533 = vmul.f32 %v525, 1.442695
  %v534 = vpow.pop %v533
  %v535 = vmul.f32 %v526, 1.442695
  %v536 = vpow.pop %v535
  %v537 = vmul.f32 %v527, 1.442695
  %v538 = vpow.pop %v537
  %v539 = vmul.f32 %v528, 1.442695
  %v540 = vpow.pop %v539
  %v541 = vmul.f32 %v529, 1.442695
  %v542 = vpow.pop %v541
  %v543 = vmul.f32 %v530, 1.442695
  %v544 = vpow.pop %v543
  %v545 = vsel %vm490, %v532, 0.0
  %v546 = vsel %vm491, %v534, 0.0
  %v547 = vsel %vm492, %v536, 0.0
  %v548 = vsel %vm493, %v538, 0.0
  %v549 = vsel %vm494, %v540, 0.0
  %v550 = vsel %vm495, %v542, 0.0
  %v551 = vsel %vm496, %v544, 0.0
  %v552 = vsel %vm504, %v545, 0.0
  %v553 = vsel %vm504, %v546, 0.0
  %v554 = vadd.f32 %v552, %v553
  %v555 = vsel %vm504, %v547, 0.0
  %v556 = vadd.f32 %v554, %v555
  %v557 = vsel %vm504, %v548, 0.0
  %v558 = vadd.f32 %v556, %v557
  %v559 = vsel %vm504, %v549, 0.0
  %v560 = vadd.f32 %v558, %v559
  %v561 = vsel %vm504, %v550, 0.0
  %v562 = vadd.f32 %v560, %v561
  %v563 = vsel %vm504, %v551, 0.0
  %v564 = vadd.f32 %v562, %v563
  %v565 = vrot.slane %v564, 4
  %v566 = vadd.f32 %v564, %v565
  %v567 = vrot.slane %v566, 2
  %v568 = vadd.f32 %v566, %v567
  %v569 = vrot.slane %v568, 1
  %v570 = vadd.f32 %v568, %v569
  %v571 = vrcp.pop %v570
  %v572 = vmul.f32 %v545, %v571
  %v573 = vmul.f32 %v546, %v571
  %v574 = vmul.f32 %v547, %v571
  %v575 = vmul.f32 %v548, %v571
  %v576 = vmul.f32 %v549, %v571
  %v577 = vmul.f32 %v550, %v571
  %v578 = vmul.f32 %v551, %v571
  %579 = vst.msk [vmem:[%s7] sm:$0xff] %vm504, %v572
  %580 = vst.msk [vmem:[%s7 + $0x8] sm:$0xff] %vm504, %v573
  %581 = vst.msk [vmem:[%s7 + $0x10] sm:$0xff] %vm504, %v574
  %582 = vst.msk [vmem:[%s7 + $0x18] sm:$0xff] %vm504, %v575
  %583 = vst.msk [vmem:[%s7 + $0x20] sm:$0xff] %vm504, %v576
  %584 = vst.msk [vmem:[%s7 + $0x28] sm:$0xff] %vm504, %v577
  %585 = vst.msk [vmem:[%s7 + $0x30] sm:$0xff] %vm504, %v578
  // Predicated region
  $region30: #{tpu_custom_call.1} parent=0 // pred_check
    _
  $region31: #{tpu_custom_call.1} parent=0 // pred_check_branch
    %587 = sbr.rel (0) target = $region33
  $region32: #{tpu_custom_call.1} parent=0 // pred_region
    _
  $region33: #{tpu_custom_call.1} parent=0 // pred_fallthru
    _
  // Predicated region
  $region34: #{tpu_custom_call.1} parent=0 // pred_check
    _
  $region35: #{tpu_custom_call.1} parent=0 // pred_check_branch
    %589 = sbr.rel (0) target = $region37
  $region36: #{tpu_custom_call.1} parent=0 // pred_region
    _
  $region37: #{tpu_custom_call.1} parent=0 // pred_fallthru
    _

</llo_original>
